<compile_context>
chip_gen: v7x
topology: tpu7x:2x2x1
jax: 0.10.0
libtpu: 0.0.40
codegen_flags: <defaults>
</compile_context>

<pallas_src>
import jax
import jax.numpy as jnp
from jax.experimental import pallas as pl
from jax.experimental.pallas import tpu as pltpu

H1, H2 = 32, 16     # hidden sizes from the PyTorch module


def mlp_kernel(x_ref, w1_ref, b1_ref, w2_ref, b2_ref, w3_ref, b3_ref, o_ref):
    """Fused 3-layer MLP: (Linear+ReLU) -> (Linear+ReLU) -> Linear, f32 accum."""
    x = x_ref[...]

    h1 = jnp.dot(x, w1_ref[...], preferred_element_type=jnp.float32) + b1_ref[...]
    h1 = jnp.maximum(h1, 0.0)

    h2 = jnp.dot(h1.astype(w2_ref.dtype), w2_ref[...],
                 preferred_element_type=jnp.float32) + b2_ref[...]
    h2 = jnp.maximum(h2, 0.0)

    q = jnp.dot(h2.astype(w3_ref.dtype), w3_ref[...],
                preferred_element_type=jnp.float32) + b3_ref[...]
    o_ref[...] = q.astype(o_ref.dtype)


def _round_up(n, m):
    return ((n + m - 1) // m) * m


def prepare_params(params, operand_dtype=None):
    """One-time prep (call at init / after each optimizer step, NOT per forward).

    Casts weights to the MXU operand dtype (e.g. bf16 on v5e/v6e/v7x to halve
    HBM reads); biases stay f32 because they are added to the f32 accumulator.
    """
    w1, b1, w2, b2, w3, b3 = params
    if operand_dtype is not None:
        w1, w2, w3 = (w.astype(operand_dtype) for w in (w1, w2, w3))
    b1, b2, b3 = (b.astype(jnp.float32) for b in (b1, b2, b3))
    return (w1, b1, w2, b2, w3, b3)


def action_state_model_forward(x, prepared_params, *, tile_b=2048,
                               out_dtype=jnp.float32):
    """Fused DQN Q-network forward (single pallas_call dispatch).

    x: (B, state_dim); ideally already in the operand dtype of prepared_params.
    prepared_params: output of prepare_params() — W stored (in, out), b (1, out).
    tile_b: max rows per grid step (large values amortize per-step overhead).
    out_dtype: Q-value output dtype (bf16 is fine if the consumer is argmax).
    """
    w1, b1, w2, b2, w3, b3 = prepared_params
    B, state_dim = x.shape
    action_dim = w3.shape[1]

    operand_dtype = w1.dtype
    if x.dtype != operand_dtype:
        # Caller should ideally cast once outside; kept for correctness.
        x = x.astype(operand_dtype)

    # Sublane granularity for the batch axis: 8 rows for 32-bit operands,
    # 16 for 16-bit (bf16 packs two rows per sublane).
    sub = 16 if jnp.dtype(operand_dtype).itemsize < 4 else 8

    # Batch tiling with NO padding of x: cdiv grid, Pallas masks the ragged
    # last block (rows are independent).  When the whole batch fits in one
    # tile, still split it in two so v7x's two TensorCores both get work.
    if B > tile_b:
        tb = _round_up(tile_b, sub)
    else:
        tb = _round_up(pl.cdiv(B, 2), sub)
    tb = max(tb, sub)
    grid = (pl.cdiv(B, tb),)

    resident = lambda i: (0, 0)   # constant block index -> weights stay in VMEM

    flops = 2 * B * (state_dim * H1 + H1 * H2 + H2 * action_dim)
    bytes_accessed = (
        x.size * x.dtype.itemsize
        + sum(int(a.size) * a.dtype.itemsize for a in (w1, b1, w2, b2, w3, b3))
        + B * action_dim * jnp.dtype(out_dtype).itemsize
    )

    return pl.pallas_call(
        mlp_kernel,
        out_shape=jax.ShapeDtypeStruct((B, action_dim), out_dtype),
        grid=grid,
        in_specs=[
            pl.BlockSpec((tb, state_dim), lambda i: (i, 0)),   # x: batch-tiled
            pl.BlockSpec(w1.shape, resident),
            pl.BlockSpec(b1.shape, resident),
            pl.BlockSpec(w2.shape, resident),
            pl.BlockSpec(b2.shape, resident),
            pl.BlockSpec(w3.shape, resident),
            pl.BlockSpec(b3.shape, resident),
        ],
        # Narrow output: last block dim == full array dim (action_dim) — legal,
        # and avoids the 64x write amplification of a 128-lane padded slab.
        out_specs=pl.BlockSpec((tb, action_dim), lambda i: (i, 0)),
        compiler_params=pltpu.CompilerParams(
            dimension_semantics=("parallel",)),                 # v7x: 2 TCs split batch
        cost_estimate=pl.CostEstimate(
            flops=flops, bytes_accessed=bytes_accessed, transcendentals=0),
    )(x, w1, b1, w2, b2, w3, b3)


def init_params(key, state_dim, action_dim):
    """Deterministic init matching PyTorch Linear default (U(-1/sqrt(fan_in), +))."""
    dims = [(state_dim, H1), (H1, H2), (H2, action_dim)]
    params = []
    for (fan_in, fan_out) in dims:
        key, kw, kb = jax.random.split(key, 3)
        bound = 1.0 / jnp.sqrt(float(fan_in))
        w = jax.random.uniform(kw, (fan_in, fan_out), jnp.float32, -bound, bound)
        b = jax.random.uniform(kb, (1, fan_out), jnp.float32, -bound, bound)
        params += [w, b]
    return tuple(params)


def reference_forward(x, params):
    """Pure-JAX reference for correctness checking."""
    w1, b1, w2, b2, w3, b3 = params
    h1 = jnp.maximum(x @ w1 + b1, 0.0)
    h2 = jnp.maximum(h1 @ w2 + b2, 0.0)
    return h2 @ w3 + b3


# TODO(synk): epsilon-greedy get_action() and the Adam update() are host-side
# control flow / training logic with no Pallas forward-pass equivalent.

if __name__ == "__main__":
    # Small shapes consistent with a DQN on e.g. CartPole: state_dim=4, action_dim=2.
    state_dim, action_dim, batch = 4, 2, 2

    key = jax.random.PRNGKey(0)
    key, kx = jax.random.split(key)
    x = jax.random.normal(kx, (batch, state_dim), jnp.float32)

    params = init_params(key, state_dim, action_dim)
    q_ref = reference_forward(x, params)

    # --- f32 path, tiny batch (single ragged block) ---
    prepared_f32 = prepare_params(params)
    q = jax.block_until_ready(action_state_model_forward(x, prepared_f32))
    assert q.shape == (batch, action_dim)
    assert jnp.allclose(q, q_ref, atol=1e-5, rtol=1e-5), "f32 mismatch vs reference"

    # --- f32 path, larger batch with multi-step grid + ragged tail ---
    key, kx2 = jax.random.split(key)
    x_big = jax.random.normal(kx2, (2050, state_dim), jnp.float32)
    q_big = jax.block_until_ready(
        action_state_model_forward(x_big, prepared_f32, tile_b=1024))
    assert q_big.shape == (2050, action_dim)
    assert jnp.allclose(q_big, reference_forward(x_big, params),
                        atol=1e-4, rtol=1e-4), "tiled f32 mismatch vs reference"

    # --- bf16 operand path (f32 accumulation), looser tolerance ---
    prepared_bf16 = prepare_params(params, operand_dtype=jnp.bfloat16)
    x_bf16 = x_big.astype(jnp.bfloat16)
    q_bf16 = jax.block_until_ready(
        action_state_model_forward(x_bf16, prepared_bf16))
    assert q_bf16.shape == (2050, action_dim)
    assert jnp.allclose(q_bf16.astype(jnp.float32),
                        reference_forward(x_big, params),
                        atol=5e-2, rtol=5e-2), "bf16 mismatch vs reference"

    print("KERNEL_OK")
</pallas_src>

<mosaic_0001>
module attributes {stable_mosaic.version = 11 : i64} {
  func.func @mlp_kernel(%arg0: i32, %arg1: memref<8x4xf32, #tpu.memory_space<vmem>>, %arg2: memref<4x32xf32, #tpu.memory_space<vmem>>, %arg3: memref<1x32xf32, #tpu.memory_space<vmem>>, %arg4: memref<32x16xf32, #tpu.memory_space<vmem>>, %arg5: memref<1x16xf32, #tpu.memory_space<vmem>>, %arg6: memref<16x2xf32, #tpu.memory_space<vmem>>, %arg7: memref<1x2xf32, #tpu.memory_space<vmem>>, %arg8: memref<8x2xf32, #tpu.memory_space<vmem>>) attributes {dimension_semantics = [#tpu.dimension_semantics<parallel>], iteration_bounds = array<i64: 1>, scalar_prefetch = 0 : i64, scratch_operands = 0 : i64, tpu.core_type = #tpu.core_type<tc>, window_params = [{transform_indices = @transform_0, window_bounds = array<i64: 8, 4>}, {pipeline_mode = #tpu.pipeline_mode<synchronous>, transform_indices = @transform_1, window_bounds = array<i64: 4, 32>}, {pipeline_mode = #tpu.pipeline_mode<synchronous>, transform_indices = @transform_2, window_bounds = array<i64: 1, 32>}, {pipeline_mode = #tpu.pipeline_mode<synchronous>, transform_indices = @transform_3, window_bounds = array<i64: 32, 16>}, {pipeline_mode = #tpu.pipeline_mode<synchronous>, transform_indices = @transform_4, window_bounds = array<i64: 1, 16>}, {pipeline_mode = #tpu.pipeline_mode<synchronous>, transform_indices = @transform_5, window_bounds = array<i64: 16, 2>}, {pipeline_mode = #tpu.pipeline_mode<synchronous>, transform_indices = @transform_6, window_bounds = array<i64: 1, 2>}, {transform_indices = @transform_7, window_bounds = array<i64: 8, 2>}]} {
    %c0 = arith.constant 0 : index
    %c0_0 = arith.constant 0 : index
    %0 = vector.load %arg1[%c0, %c0_0] : memref<8x4xf32, #tpu.memory_space<vmem>>, vector<8x4xf32>
    %c0_1 = arith.constant 0 : index
    %c0_2 = arith.constant 0 : index
    %1 = vector.load %arg2[%c0_1, %c0_2] : memref<4x32xf32, #tpu.memory_space<vmem>>, vector<4x32xf32>
    %cst = arith.constant dense<0.000000e+00> : vector<8x32xf32>
    %2 = tpu.matmul %0, %1, %cst {dimension_numbers = #tpu.dot_dimension_numbers<[1], [0], [0], [1], [0, 0, 1, 1], [], []>} : vector<8x4xf32>, vector<4x32xf32>, vector<8x32xf32> -> vector<8x32xf32>
    %c0_3 = arith.constant 0 : index
    %c0_4 = arith.constant 0 : index
    %3 = vector.load %arg3[%c0_3, %c0_4] : memref<1x32xf32, #tpu.memory_space<vmem>>, vector<1x32xf32>
    %4 = vector.broadcast %3 : vector<1x32xf32> to vector<8x32xf32>
    %5 = arith.addf %2, %4 : vector<8x32xf32>
    %cst_5 = arith.constant 0.000000e+00 : f32
    %6 = vector.broadcast %cst_5 : f32 to vector<8x32xf32>
    %7 = arith.maximumf %5, %6 : vector<8x32xf32>
    %c0_6 = arith.constant 0 : index
    %c0_7 = arith.constant 0 : index
    %8 = vector.load %arg4[%c0_6, %c0_7] : memref<32x16xf32, #tpu.memory_space<vmem>>, vector<32x16xf32>
    %cst_8 = arith.constant dense<0.000000e+00> : vector<8x16xf32>
    %9 = tpu.matmul %7, %8, %cst_8 {dimension_numbers = #tpu.dot_dimension_numbers<[1], [0], [0], [1], [0, 0, 1, 1], [], []>} : vector<8x32xf32>, vector<32x16xf32>, vector<8x16xf32> -> vector<8x16xf32>
    %c0_9 = arith.constant 0 : index
    %c0_10 = arith.constant 0 : index
    %10 = vector.load %arg5[%c0_9, %c0_10] : memref<1x16xf32, #tpu.memory_space<vmem>>, vector<1x16xf32>
    %11 = vector.broadcast %10 : vector<1x16xf32> to vector<8x16xf32>
    %12 = arith.addf %9, %11 : vector<8x16xf32>
    %cst_11 = arith.constant 0.000000e+00 : f32
    %13 = vector.broadcast %cst_11 : f32 to vector<8x16xf32>
    %14 = arith.maximumf %12, %13 : vector<8x16xf32>
    %c0_12 = arith.constant 0 : index
    %c0_13 = arith.constant 0 : index
    %15 = vector.load %arg6[%c0_12, %c0_13] : memref<16x2xf32, #tpu.memory_space<vmem>>, vector<16x2xf32>
    %cst_14 = arith.constant dense<0.000000e+00> : vector<8x2xf32>
    %16 = tpu.matmul %14, %15, %cst_14 {dimension_numbers = #tpu.dot_dimension_numbers<[1], [0], [0], [1], [0, 0, 1, 1], [], []>} : vector<8x16xf32>, vector<16x2xf32>, vector<8x2xf32> -> vector<8x2xf32>
    %c0_15 = arith.constant 0 : index
    %c0_16 = arith.constant 0 : index
    %17 = vector.load %arg7[%c0_15, %c0_16] : memref<1x2xf32, #tpu.memory_space<vmem>>, vector<1x2xf32>
    %18 = vector.broadcast %17 : vector<1x2xf32> to vector<8x2xf32>
    %19 = arith.addf %16, %18 : vector<8x2xf32>
    %c0_17 = arith.constant 0 : index
    %c0_18 = arith.constant 0 : index
    %20 = vector.load %arg8[%c0_17, %c0_18] : memref<8x2xf32, #tpu.memory_space<vmem>>, vector<8x2xf32>
    tpu.vector_store %arg8[%c0_17, %c0_18], %19 {strides = array<i32>} : memref<8x2xf32, #tpu.memory_space<vmem>>, vector<8x2xf32>,
    return
  }
  func.func @transform_0(%arg0: i32) -> (i32, i32) {
    %c0_i32 = arith.constant 0 : i32
    %c0_i32_0 = arith.constant 0 : i32
    return %arg0, %c0_i32 : i32, i32
  }
  func.func @transform_1(%arg0: i32) -> (i32, i32) {
    %c0_i32 = arith.constant 0 : i32
    %c0_i32_0 = arith.constant 0 : i32
    %c0_i32_1 = arith.constant 0 : i32
    return %c0_i32, %c0_i32_0 : i32, i32
  }
  func.func @transform_2(%arg0: i32) -> (i32, i32) {
    %c0_i32 = arith.constant 0 : i32
    %c0_i32_0 = arith.constant 0 : i32
    %c0_i32_1 = arith.constant 0 : i32
    return %c0_i32, %c0_i32_0 : i32, i32
  }
  func.func @transform_3(%arg0: i32) -> (i32, i32) {
    %c0_i32 = arith.constant 0 : i32
    %c0_i32_0 = arith.constant 0 : i32
    %c0_i32_1 = arith.constant 0 : i32
    return %c0_i32, %c0_i32_0 : i32, i32
  }
  func.func @transform_4(%arg0: i32) -> (i32, i32) {
    %c0_i32 = arith.constant 0 : i32
    %c0_i32_0 = arith.constant 0 : i32
    %c0_i32_1 = arith.constant 0 : i32
    return %c0_i32, %c0_i32_0 : i32, i32
  }
  func.func @transform_5(%arg0: i32) -> (i32, i32) {
    %c0_i32 = arith.constant 0 : i32
    %c0_i32_0 = arith.constant 0 : i32
    %c0_i32_1 = arith.constant 0 : i32
    return %c0_i32, %c0_i32_0 : i32, i32
  }
  func.func @transform_6(%arg0: i32) -> (i32, i32) {
    %c0_i32 = arith.constant 0 : i32
    %c0_i32_0 = arith.constant 0 : i32
    %c0_i32_1 = arith.constant 0 : i32
    return %c0_i32, %c0_i32_0 : i32, i32
  }
  func.func @transform_7(%arg0: i32) -> (i32, i32) {
    %c0_i32 = arith.constant 0 : i32
    %c0_i32_0 = arith.constant 0 : i32
    return %arg0, %c0_i32 : i32, i32
  }
}

</mosaic_0001>

<llo_original>
// kernel: tpu_custom_call.1
$region0: #{tpu_custom_call.1}
  #allocation0 [shape = 'u32[]', space=smem, size = 0x4, offset = 0x4, fixed_abs, tag = 'smem constant byte address 0x4 - core index']
  #allocation1 [shape = 'u32[144,128]{1,0:T(1,128)}', space=vmem, size = 0x12000, scoped, tag = 'internal scratch']
  %s0 = inlined_call_operand.vmem [shape: f32[2,4], index: 0, kind: input, shape index: {}]
  %s1 = inlined_call_operand.vmem [shape: f32[4,32], index: 1, kind: input, shape index: {}]
  %s2 = inlined_call_operand.vmem [shape: f32[1,32], index: 2, kind: input, shape index: {}]
  %s3 = inlined_call_operand.vmem [shape: f32[32,16], index: 3, kind: input, shape index: {}]
  %s4 = inlined_call_operand.vmem [shape: f32[1,16], index: 4, kind: input, shape index: {}]
  %s5 = inlined_call_operand.vmem [shape: f32[16,2], index: 5, kind: input, shape index: {}]
  %s6 = inlined_call_operand.vmem [shape: f32[1,2], index: 6, kind: input, shape index: {}]
  %s7 = inlined_call_operand.hbm [shape: f32[2,2], index: 7, kind: output, shape index: {}]
  %s8 = sld [smem:[#allocation0]]
  $region38: #{tpu_custom_call.1} parent=0
    _
  %s10 = ssub.s32 1, %s8
  %s11 = scalar_select 0, %s10, %s8
  $region1: #{tpu_custom_call.1} parent=0
    #allocation2 [shape = 'u8[4096]{0}', space=vmem, size = 0x1000, scoped, tag = 'output window, operand 0, single buffered']
    #allocation3 [shape = 's32[1]{0}', space=sflag, size = 0x4, scoped, tag = 'scoped memory for tpu_custom_call.1']
    %12 = vsyncpa [#allocation3], 0
    // Predicated region
    $region2: #{tpu_custom_call.1} parent=1 // pred_check
      _
    $region3: #{tpu_custom_call.1} parent=1 // pred_check_branch
      %14 = sbr.rel (0) target = $region5
    $region4: #{tpu_custom_call.1} parent=1 // pred_region
      _
    $region5: #{tpu_custom_call.1} parent=1 // pred_fallthru
      _
    // Predicated region
    $region6: #{tpu_custom_call.1} parent=1 // pred_check
      _
    $region7: #{tpu_custom_call.1} parent=1 // pred_check_branch
      %16 = sbr.rel (0) target = $region9
    $region8: #{tpu_custom_call.1} parent=1 // pred_region
      _
    $region9: #{tpu_custom_call.1} parent=1 // pred_fallthru
      _
    // Predicated region
    $region10: #{tpu_custom_call.1} parent=1 // pred_check
      _
    $region11: #{tpu_custom_call.1} parent=1 // pred_check_branch
      %18 = sbr.rel (0) target = $region13
    $region12: #{tpu_custom_call.1} parent=1 // pred_region
      _
    $region13: #{tpu_custom_call.1} parent=1 // pred_fallthru
      _
    // Predicated region
    $region14: #{tpu_custom_call.1} parent=1 // pred_check
      _
    $region15: #{tpu_custom_call.1} parent=1 // pred_check_branch
      %20 = sbr.rel (0) target = $region17
    $region16: #{tpu_custom_call.1} parent=1 // pred_region
      _
    $region17: #{tpu_custom_call.1} parent=1 // pred_fallthru
      _
    // Predicated region
    $region18: #{tpu_custom_call.1} parent=1 // pred_check
      _
    $region19: #{tpu_custom_call.1} parent=1 // pred_check_branch
      %22 = sbr.rel (0) target = $region21
    $region20: #{tpu_custom_call.1} parent=1 // pred_region
      _
    $region21: #{tpu_custom_call.1} parent=1 // pred_fallthru
      _
    // Predicated region
    $region22: #{tpu_custom_call.1} parent=1 // pred_check
      _
    $region23: #{tpu_custom_call.1} parent=1 // pred_check_branch
      %24 = sbr.rel (0) target = $region25
    $region24: #{tpu_custom_call.1} parent=1 // pred_region
      _
    $region25: #{tpu_custom_call.1} parent=1 // pred_fallthru
      _
    // Predicated region
    $region26: #{tpu_custom_call.1} parent=1 // pred_check
      _
    $region27: #{tpu_custom_call.1} parent=1 // pred_check_branch
      %26 = sbr.rel (0) target = $region29
    $region28: #{tpu_custom_call.1} parent=1 // pred_region
      _
    $region29: #{tpu_custom_call.1} parent=1 // pred_fallthru
      _
    %v27 = vld [vmem:[%s0] sm:$0xff]
    %v28 = vld [vmem:[%s1] sm:$0xf]
    %v29 = vld [vmem:[%s2] sm:$0x1]
    %v31 = vlaneseq
    %v32 = vshrl.u32 %v31, 7
    %v33 = vsub.s32 0, %v32
    %v34 = vrot.slane %v29, %v33
    %vm36 = vcmask 31744
    %v38 = vsel %vm36, %v27, 0
    %vm40 = vcmask 1043456
    %v42 = vsel %vm40, %v28, 0
    %44 = vmatprep.subr.mxu0 0.0
    %45 = vmatpush1.msra.mxu0 %v42
    %46 = vmatprep.subr.mxu0 0.0
    %47 = vmatpush1.msra.mxu0 0.0
    %48 = vmatprep.subr.mxu0 0.0
    %49 = vmatpush1.msra.mxu0 0.0
    %50 = vmatprep.subr.mxu0 0.0
    %51 = vmatpush1.msra.mxu0 0.0
    %52 = vmatprep.subr.mxu0 0.0
    %53 = vmatpush1.msra.mxu0 0.0
    %54 = vmatprep.subr.mxu0 0.0
    %55 = vmatpush1.msra.mxu0 0.0
    %56 = vmatprep.subr.mxu0 0.0
    %57 = vmatpush1.msra.mxu0 0.0
    %58 = vmatprep.subr.mxu0 0.0
    %59 = vmatpush1.msra.mxu0 0.0
    %60 = vmatprep.subr.mxu0 0.0
    %61 = vmatpush1.msra.mxu0 0.0
    %62 = vmatprep.subr.mxu0 0.0
    %63 = vmatpush1.msra.mxu0 0.0
    %64 = vmatprep.subr.mxu0 0.0
    %65 = vmatpush1.msra.mxu0 0.0
    %66 = vmatprep.subr.mxu0 0.0
    %67 = vmatpush1.msra.mxu0 0.0
    %68 = vmatprep.subr.mxu0 0.0
    %69 = vmatpush1.msra.mxu0 0.0
    %70 = vmatprep.subr.mxu0 0.0
    %71 = vmatpush1.msra.mxu0 0.0
    %72 = vmatprep.subr.mxu0 0.0
    %73 = vmatpush1.msra.mxu0 0.0
    %74 = vmatprep.subr.mxu0 0.0
    %75 = vmatpush1.msra.mxu0 0.0
    %76 = vmatprep.subr.mxu0 0.0
    %77 = vmatpush1.msra.mxu0 0.0
    %78 = vmatprep.subr.mxu0 0.0
    %79 = vmatpush1.msra.mxu0 0.0
    %80 = vmatprep.subr.mxu0 0.0
    %81 = vmatpush1.msra.mxu0 0.0
    %82 = vmatprep.subr.mxu0 0.0
    %83 = vmatpush1.msra.mxu0 0.0
    %84 = vmatprep.subr.mxu0 0.0
    %85 = vmatpush1.msra.mxu0 0.0
    %86 = vmatprep.subr.mxu0 0.0
    %87 = vmatpush1.msra.mxu0 0.0
    %88 = vmatprep.subr.mxu0 0.0
    %89 = vmatpush1.msra.mxu0 0.0
    %90 = vmatprep.subr.mxu0 0.0
    %91 = vmatpush1.msra.mxu0 0.0
    %92 = vmatprep.subr.mxu0 0.0
    %93 = vmatpush1.msra.mxu0 0.0
    %94 = vmatprep.subr.mxu0 0.0
    %95 = vmatpush1.msra.mxu0 0.0
    %96 = vmatprep.subr.mxu0 0.0
    %97 = vmatpush1.msra.mxu0 0.0
    %98 = vmatprep.subr.mxu0 0.0
    %99 = vmatpush1.msra.mxu0 0.0
    %100 = vmatprep.subr.mxu0 0.0
    %101 = vmatpush1.msra.mxu0 0.0
    %102 = vmatprep.subr.mxu0 0.0
    %103 = vmatpush1.msra.mxu0 0.0
    %104 = vmatprep.subr.mxu0 0.0
    %105 = vmatpush1.msra.mxu0 0.0
    %106 = vmatprep.subr.mxu0 0.0
    %107 = vmatpush1.msra.mxu0 0.0
    %108 = vmatprep.mubr.f32.mxu0 0.0
    %109 = vmatmul.mubr.f32.gmra.mrb[0].mxu0 %v38
    %v110 = vpop.f32.mrb[0].mxu0
    %v111 = vadd.f32 %v34, %v110
    %v112 = vpop.f32.mrb[0].mxu0
    %113 = vdwg.mxu0
    %v114 = vmax.f32 %v111, 0.0
    %v115 = vld [vmem:[%s3] sm:$0xff]
    %v116 = vld [vmem:[%s3 + $0x8] sm:$0xff]
    %v117 = vld [vmem:[%s3 + $0x10] sm:$0xff]
    %v118 = vld [vmem:[%s3 + $0x18] sm:$0xff]
    %v119 = vld [vmem:[%s4] sm:$0x1]
    %v121 = vlaneseq
    %v122 = vshrl.u32 %v121, 7
    %v123 = vsub.s32 0, %v122
    %v124 = vrot.slane %v119, %v123
    %vm126 = vcmask 261120
    %v128 = vsel %vm126, %v114, 0
    %130 = vmatprep.subr.mxu0 0.0
    %131 = vmatpush1.msra.mxu0 %v115
    %132 = vmatprep.subr.mxu0 0.0
    %133 = vmatpush1.msra.mxu0 %v116
    %134 = vmatprep.subr.mxu0 0.0
    %135 = vmatpush1.msra.mxu0 %v117
    %136 = vmatprep.subr.mxu0 0.0
    %137 = vmatpush1.msra.mxu0 %v118
    %138 = vmatprep.subr.mxu0 0.0
    %139 = vmatpush1.msra.mxu0 0.0
    %140 = vmatprep.subr.mxu0 0.0
    %141 = vmatpush1.msra.mxu0 0.0
    %142 = vmatprep.subr.mxu0 0.0
    %143 = vmatpush1.msra.mxu0 0.0
    %144 = vmatprep.subr.mxu0 0.0
    %145 = vmatpush1.msra.mxu0 0.0
    %146 = vmatprep.subr.mxu0 0.0
    %147 = vmatpush1.msra.mxu0 0.0
    %148 = vmatprep.subr.mxu0 0.0
    %149 = vmatpush1.msra.mxu0 0.0
    %150 = vmatprep.subr.mxu0 0.0
    %151 = vmatpush1.msra.mxu0 0.0
    %152 = vmatprep.subr.mxu0 0.0
    %153 = vmatpush1.msra.mxu0 0.0
    %154 = vmatprep.subr.mxu0 0.0
    %155 = vmatpush1.msra.mxu0 0.0
    %156 = vmatprep.subr.mxu0 0.0
    %157 = vmatpush1.msra.mxu0 0.0
    %158 = vmatprep.subr.mxu0 0.0
    %159 = vmatpush1.msra.mxu0 0.0
    %160 = vmatprep.subr.mxu0 0.0
    %161 = vmatpush1.msra.mxu0 0.0
    %162 = vmatprep.subr.mxu0 0.0
    %163 = vmatpush1.msra.mxu0 0.0
    %164 = vmatprep.subr.mxu0 0.0
    %165 = vmatpush1.msra.mxu0 0.0
    %166 = vmatprep.subr.mxu0 0.0
    %167 = vmatpush1.msra.mxu0 0.0
    %168 = vmatprep.subr.mxu0 0.0
    %169 = vmatpush1.msra.mxu0 0.0
    %170 = vmatprep.subr.mxu0 0.0
    %171 = vmatpush1.msra.mxu0 0.0
    %172 = vmatprep.subr.mxu0 0.0
    %173 = vmatpush1.msra.mxu0 0.0
    %174 = vmatprep.subr.mxu0 0.0
    %175 = vmatpush1.msra.mxu0 0.0
    %176 = vmatprep.subr.mxu0 0.0
    %177 = vmatpush1.msra.mxu0 0.0
    %178 = vmatprep.subr.mxu0 0.0
    %179 = vmatpush1.msra.mxu0 0.0
    %180 = vmatprep.subr.mxu0 0.0
    %181 = vmatpush1.msra.mxu0 0.0
    %182 = vmatprep.subr.mxu0 0.0
    %183 = vmatpush1.msra.mxu0 0.0
    %184 = vmatprep.subr.mxu0 0.0
    %185 = vmatpush1.msra.mxu0 0.0
    %186 = vmatprep.subr.mxu0 0.0
    %187 = vmatpush1.msra.mxu0 0.0
    %188 = vmatprep.subr.mxu0 0.0
    %189 = vmatpush1.msra.mxu0 0.0
    %190 = vmatprep.subr.mxu0 0.0
    %191 = vmatpush1.msra.mxu0 0.0
    %192 = vmatprep.subr.mxu0 0.0
    %193 = vmatpush1.msra.mxu0 0.0
    %194 = vmatprep.mubr.f32.mxu0 0.0
    %195 = vmatmul.mubr.f32.gmra.mrb[0].mxu0 %v128
    %v196 = vpop.f32.mrb[0].mxu0
    %v197 = vadd.f32 %v124, %v196
    %v198 = vpop.f32.mrb[0].mxu0
    %199 = vdwg.mxu0
    %v200 = vmax.f32 %v197, 0.0
    %v201 = vld [vmem:[%s5] sm:$0xff]
    %v202 = vld [vmem:[%s5 + $0x8] sm:$0xff]
    %v203 = vld [vmem:[%s6] sm:$0x1]
    %v205 = vlaneseq
    %v206 = vshrl.u32 %v205, 7
    %v207 = vsub.s32 0, %v206
    %v208 = vrot.slane %v203, %v207
    %vm210 = vcmask 130048
    %v212 = vsel %vm210, %v200, 0
    %214 = vmatprep.subr.mxu0 0.0
    %215 = vmatpush1.msra.mxu0 %v201
    %216 = vmatprep.subr.mxu0 0.0
    %217 = vmatpush1.msra.mxu0 %v202
    %218 = vmatprep.subr.mxu0 0.0
    %219 = vmatpush1.msra.mxu0 0.0
    %220 = vmatprep.subr.mxu0 0.0
    %221 = vmatpush1.msra.mxu0 0.0
    %222 = vmatprep.subr.mxu0 0.0
    %223 = vmatpush1.msra.mxu0 0.0
    %224 = vmatprep.subr.mxu0 0.0
    %225 = vmatpush1.msra.mxu0 0.0
    %226 = vmatprep.subr.mxu0 0.0
    %227 = vmatpush1.msra.mxu0 0.0
    %228 = vmatprep.subr.mxu0 0.0
    %229 = vmatpush1.msra.mxu0 0.0
    %230 = vmatprep.subr.mxu0 0.0
    %231 = vmatpush1.msra.mxu0 0.0
    %232 = vmatprep.subr.mxu0 0.0
    %233 = vmatpush1.msra.mxu0 0.0
    %234 = vmatprep.subr.mxu0 0.0
    %235 = vmatpush1.msra.mxu0 0.0
    %236 = vmatprep.subr.mxu0 0.0
    %237 = vmatpush1.msra.mxu0 0.0
    %238 = vmatprep.subr.mxu0 0.0
    %239 = vmatpush1.msra.mxu0 0.0
    %240 = vmatprep.subr.mxu0 0.0
    %241 = vmatpush1.msra.mxu0 0.0
    %242 = vmatprep.subr.mxu0 0.0
    %243 = vmatpush1.msra.mxu0 0.0
    %244 = vmatprep.subr.mxu0 0.0
    %245 = vmatpush1.msra.mxu0 0.0
    %246 = vmatprep.subr.mxu0 0.0
    %247 = vmatpush1.msra.mxu0 0.0
    %248 = vmatprep.subr.mxu0 0.0
    %249 = vmatpush1.msra.mxu0 0.0
    %250 = vmatprep.subr.mxu0 0.0
    %251 = vmatpush1.msra.mxu0 0.0
    %252 = vmatprep.subr.mxu0 0.0
    %253 = vmatpush1.msra.mxu0 0.0
    %254 = vmatprep.subr.mxu0 0.0
    %255 = vmatpush1.msra.mxu0 0.0
    %256 = vmatprep.subr.mxu0 0.0
    %257 = vmatpush1.msra.mxu0 0.0
    %258 = vmatprep.subr.mxu0 0.0
    %259 = vmatpush1.msra.mxu0 0.0
    %260 = vmatprep.subr.mxu0 0.0
    %261 = vmatpush1.msra.mxu0 0.0
    %262 = vmatprep.subr.mxu0 0.0
    %263 = vmatpush1.msra.mxu0 0.0
    %264 = vmatprep.subr.mxu0 0.0
    %265 = vmatpush1.msra.mxu0 0.0
    %266 = vmatprep.subr.mxu0 0.0
    %267 = vmatpush1.msra.mxu0 0.0
    %268 = vmatprep.subr.mxu0 0.0
    %269 = vmatpush1.msra.mxu0 0.0
    %270 = vmatprep.subr.mxu0 0.0
    %271 = vmatpush1.msra.mxu0 0.0
    %272 = vmatprep.subr.mxu0 0.0
    %273 = vmatpush1.msra.mxu0 0.0
    %274 = vmatprep.subr.mxu0 0.0
    %275 = vmatpush1.msra.mxu0 0.0
    %276 = vmatprep.subr.mxu0 0.0
    %277 = vmatpush1.msra.mxu0 0.0
    %278 = vmatprep.mubr.f32.mxu0 0.0
    %279 = vmatmul.mubr.f32.gmra.mrb[0].mxu0 %v212
    %v280 = vpop.f32.mrb[0].mxu0
    %v281 = vadd.f32 %v208, %v280
    %v282 = vpop.f32.mrb[0].mxu0
    %283 = vdwg.mxu0
    %vm284 = vcmask 15360
    %285 = vst.msk [vmem:[#allocation2] sm:$0xff] %vm284, %v281
    // Predicated region
    $region30: #{tpu_custom_call.1} parent=1 // pred_check
      _
    $region31: #{tpu_custom_call.1} parent=1 // pred_check_branch
      %287 = sbr.rel (0) target = $region33
    $region32: #{tpu_custom_call.1} parent=1 // pred_region
      %s289 = ssub.s32 128, 32
      %290 = vsyncadd [#allocation3], %s289
      %s291 = sshll.u32 [#allocation2], 4
      %s292 = int_to_ptr.vmem [resolvable:$true] %s291
      %297 = dma.vmem_to_hbm [thread:$0]  %s292, 32, %s7, [#allocation3], 32, 32, 2
    $region33: #{tpu_custom_call.1} parent=1 // pred_fallthru
      _
    // Predicated region
    $region34: #{tpu_custom_call.1} parent=1 // pred_check
      _
    $region35: #{tpu_custom_call.1} parent=1 // pred_check_branch
      %299 = sbr.rel (0) target = $region37
    $region36: #{tpu_custom_call.1} parent=1 // pred_region
      %300 = dma.done [#allocation3], 128
    $region37: #{tpu_custom_call.1} parent=1 // pred_fallthru
      _
    %301 = vsyncpa [#allocation3], 1

</llo_original>
